<compile_context>
chip_gen: v7x
topology: tpu7x:2x2x1
jax: 0.10.0
libtpu: 0.0.40
codegen_flags: <defaults>
</compile_context>

<pallas_src>
import math

import jax
import jax.numpy as jnp
from jax.experimental import pallas as pl
from jax.experimental.pallas import tpu as pltpu


# ----------------------------------------------------------------------------
# Pallas kernel: full forward pass for one batch tile.
# ----------------------------------------------------------------------------
def critic_epistemic_kernel(
    f_ref,      # (TB, K1)  bf16   [x, u, 1, 0...]
    w1_ref,     # (K1, H)   bf16   rows: [W1_x; W1_u; b1; 0...]
    w2_ref,     # (H, H)    bf16
    misc_ref,   # (4, H)    f32    rows: b2, w_mu, exp(clip(w_log_sig2)), [b_mu,0,..]
    out_ref,    # (2, TB)   f32    row 0 = mu, row 1 = log(var)
):
    # --- layer 1: single padded GEMM, bias folded into the weight (ones col) ---
    h1 = jnp.dot(f_ref[...], w1_ref[...], preferred_element_type=jnp.float32)
    h1 = jnp.maximum(h1, 0.0)

    # --- layer 2: bf16 GEMM, f32 accumulate, f32 bias add ---
    h2 = (
        jnp.dot(h1.astype(jnp.bfloat16), w2_ref[...],
                preferred_element_type=jnp.float32)
        + misc_ref[0:1, :]
    )
    h2 = jnp.maximum(h2, 0.0)

    # --- VariationalBayesianLinear.get_mean_var, lane-dense output ---
    #   mu   = h2 @ w_mu + b_mu
    #   sig2 = (h2^2) @ exp(clip(w_log_sig2, -10, 10))
    # Computed as NT matmuls so the results are (1, TB) rows (lane-dense stores,
    # no 2-lane-wide masked vst, no lane<->sublane relayout).
    nt_dims = (((1,), (1,)), ((), ()))
    mu = jax.lax.dot_general(misc_ref[1:2, :], h2, nt_dims,
                             preferred_element_type=jnp.float32)        # (1, TB)
    sig2 = jax.lax.dot_general(misc_ref[2:3, :], h2 * h2, nt_dims,
                               preferred_element_type=jnp.float32)      # (1, TB)

    out_ref[0:1, :] = mu + misc_ref[3:4, 0:1]
    out_ref[1:2, :] = jnp.log(sig2)


# ----------------------------------------------------------------------------
# Wrapper: batch-tiled pallas_call, weights VMEM-resident across tiles.
# ----------------------------------------------------------------------------
def critic_net_epistemic_forward(x, u, params):
    B, n_x = x.shape
    _, n_u = u.shape
    H = params["w2"].shape[0]
    n_in = n_x + n_u
    # Feature dim of the fused input: n_in + 1 (ones column) rounded up to 8.
    K1 = max(8, ((n_in + 1 + 7) // 8) * 8)

    # Fused / padded bf16 input: [x, u, 1, 0...]  (tiny wrapper-side concat).
    pieces = [x.astype(jnp.bfloat16), u.astype(jnp.bfloat16),
              jnp.ones((B, 1), jnp.bfloat16)]
    if K1 - n_in - 1 > 0:
        pieces.append(jnp.zeros((B, K1 - n_in - 1), jnp.bfloat16))
    f = jnp.concatenate(pieces, axis=-1)                       # (B, K1) bf16

    # Layer-1 weight + bias packed into one (K1, H) bf16 operand.
    w1p = jnp.zeros((K1, H), jnp.float32)
    w1p = w1p.at[:n_in, :].set(params["w1"])
    w1p = w1p.at[n_in, :].set(params["b1"])
    w1p = w1p.astype(jnp.bfloat16)

    w2 = params["w2"].astype(jnp.bfloat16)

    # Small resident params packed into ONE (4, H) f32 operand.
    # exp(clip(.)) recomputed per call -> stays correct if params are updated.
    w_sig2 = jnp.exp(jnp.clip(params["w_log_sig2"], -10.0, 10.0))
    b_mu_row = jnp.zeros((H,), jnp.float32).at[0].set(params["b_mu"])
    misc = jnp.stack([params["b2"], params["w_mu"], w_sig2, b_mu_row], axis=0)

    # Batch tile: big tiles amortize the per-grid-step overhead; for B > 128
    # ensure >= 2 blocks (v7x megacore). Output lane dim (TB) must be a
    # multiple of 128 (or == B), so TB is 128-aligned. Cap at 2048 so f32
    # intermediates (~8 MB) fit v5e's 16 MiB default scoped VMEM.
    if B <= 128:
        TB = B
    else:
        TB = min(2048, ((pl.cdiv(B, 2) + 127) // 128) * 128)
    num_blocks = pl.cdiv(B, TB)

    operands = (f, w1p, w2, misc)

    in_specs = [
        pl.BlockSpec((TB, K1), lambda i: (i, 0)),   # f    : batch-tiled
        pl.BlockSpec((K1, H), lambda i: (0, 0)),    # w1p  : resident
        pl.BlockSpec((H, H), lambda i: (0, 0)),     # w2   : resident
        pl.BlockSpec((4, H), lambda i: (0, 0)),     # misc : resident
    ]
    # Lane-dense output: (2, B), batch along lanes.
    out_specs = pl.BlockSpec((2, TB), lambda i: (0, i))

    flops = 2 * B * (K1 * H + H * H + 2 * H)
    bytes_accessed = sum(int(op.size) * op.dtype.itemsize for op in operands)
    bytes_accessed += B * 2 * 4
    cost = pl.CostEstimate(flops=flops, transcendentals=B,
                           bytes_accessed=bytes_accessed)

    out = pl.pallas_call(
        critic_epistemic_kernel,
        out_shape=jax.ShapeDtypeStruct((2, B), jnp.float32),
        grid=(num_blocks,),
        in_specs=in_specs,
        out_specs=out_specs,
        compiler_params=pltpu.CompilerParams(
            dimension_semantics=("parallel",)
        ),
        cost_estimate=cost,
    )(*operands)

    # Tiny (2, B) -> (B, 2) transpose to match the module's output layout.
    return out.T


# ----------------------------------------------------------------------------
# Deterministic parameter construction (mirrors the PyTorch module's shapes).
# Parameters are kept in their "natural" f32 layout; packing/casting for the
# kernel happens in the wrapper.
# ----------------------------------------------------------------------------
def make_params(key, n_x, n_u, n_hidden=256):
    k1, k2, k3, k4, k5 = jax.random.split(key, 5)
    n_in = n_x + n_u

    def unif(k, fan_in, shape):
        bound = 1.0 / math.sqrt(fan_in)
        return jax.random.uniform(k, shape, jnp.float32, -bound, bound)

    # nn.Linear(n_in, H): weight stored transposed (n_in, H).
    w1 = unif(k1, n_in, (n_in, n_hidden))
    b1 = unif(k2, n_in, (n_hidden,))
    # nn.Linear(H, H)
    w2 = unif(k3, n_hidden, (n_hidden, n_hidden))
    b2 = unif(k4, n_hidden, (n_hidden,))
    # VariationalBayesianLinear(H, 1): weight_mu uniform-ish,
    # weight_log_sig2 = -10, bias_mu = 0 (no bias variance term in the module).
    w_mu = unif(k5, n_hidden, (n_hidden,))
    w_log_sig2 = jnp.full((n_hidden,), -10.0, jnp.float32)
    b_mu = jnp.zeros((), jnp.float32)

    return {"w1": w1, "b1": b1, "w2": w2, "b2": b2,
            "w_mu": w_mu, "w_log_sig2": w_log_sig2, "b_mu": b_mu}


# ----------------------------------------------------------------------------
# Pure-JAX reference with the identical dtype strategy (sanity check).
# ----------------------------------------------------------------------------
def reference_forward(x, u, p):
    f = jnp.concatenate([x.astype(jnp.bfloat16), u.astype(jnp.bfloat16)], -1)
    w1 = p["w1"].astype(jnp.bfloat16)
    w2 = p["w2"].astype(jnp.bfloat16)
    # b1 goes through the bf16 weight row in the kernel -> round it the same way.
    b1 = p["b1"].astype(jnp.bfloat16).astype(jnp.float32)
    h1 = jnp.dot(f, w1, preferred_element_type=jnp.float32) + b1
    h1 = jnp.maximum(h1, 0.0)
    h2 = (jnp.dot(h1.astype(jnp.bfloat16), w2,
                  preferred_element_type=jnp.float32) + p["b2"])
    h2 = jnp.maximum(h2, 0.0)
    w_sig2 = jnp.exp(jnp.clip(p["w_log_sig2"], -10.0, 10.0))
    mu = h2 @ p["w_mu"] + p["b_mu"]
    sig2 = (h2 * h2) @ w_sig2
    return jnp.stack([mu, jnp.log(sig2)], axis=-1)


if __name__ == "__main__":
    # Small shapes consistent with the module:
    #   n_x = (4,), n_u = (2,), n_hidden = 256 (head input hardcoded to 256)
    B, NX, NU, H = 8, 4, 2, 256

    key = jax.random.PRNGKey(0)
    kx, ku, kp = jax.random.split(key, 3)
    x = jax.random.normal(kx, (B, NX), jnp.float32)
    u = jax.random.normal(ku, (B, NU), jnp.float32)

    params = make_params(kp, NX, NU, H)

    out = critic_net_epistemic_forward(x, u, params)
    out = jax.block_until_ready(out)

    ref = reference_forward(x, u, params)
    assert out.shape == (B, 2)
    assert bool(jnp.allclose(out, ref, atol=1e-3, rtol=1e-3)), (out, ref)

    print("KERNEL_OK")
</pallas_src>

<mosaic_0001>
module attributes {stable_mosaic.version = 11 : i64} {
  func.func @critic_epistemic_kernel(%arg0: i32, %arg1: memref<8x8xbf16, #tpu.memory_space<vmem>>, %arg2: memref<8x256xbf16, #tpu.memory_space<vmem>>, %arg3: memref<256x256xbf16, #tpu.memory_space<vmem>>, %arg4: memref<4x256xf32, #tpu.memory_space<vmem>>, %arg5: memref<2x8xf32, #tpu.memory_space<vmem>>) attributes {dimension_semantics = [#tpu.dimension_semantics<parallel>], iteration_bounds = array<i64: 1>, scalar_prefetch = 0 : i64, scratch_operands = 0 : i64, tpu.core_type = #tpu.core_type<tc>, window_params = [{transform_indices = @transform_0, window_bounds = array<i64: 8, 8>}, {pipeline_mode = #tpu.pipeline_mode<synchronous>, transform_indices = @transform_1, window_bounds = array<i64: 8, 256>}, {pipeline_mode = #tpu.pipeline_mode<synchronous>, transform_indices = @transform_2, window_bounds = array<i64: 256, 256>}, {pipeline_mode = #tpu.pipeline_mode<synchronous>, transform_indices = @transform_3, window_bounds = array<i64: 4, 256>}, {transform_indices = @transform_4, window_bounds = array<i64: 2, 8>}]} {
    %c0 = arith.constant 0 : index
    %c0_0 = arith.constant 0 : index
    %0 = vector.load %arg1[%c0, %c0_0] : memref<8x8xbf16, #tpu.memory_space<vmem>>, vector<8x8xbf16>
    %c0_1 = arith.constant 0 : index
    %c0_2 = arith.constant 0 : index
    %1 = vector.load %arg2[%c0_1, %c0_2] : memref<8x256xbf16, #tpu.memory_space<vmem>>, vector<8x256xbf16>
    %cst = arith.constant dense<0.000000e+00> : vector<8x256xf32>
    %2 = tpu.matmul %0, %1, %cst {dimension_numbers = #tpu.dot_dimension_numbers<[1], [0], [0], [1], [0, 0, 1, 1], [], []>} : vector<8x8xbf16>, vector<8x256xbf16>, vector<8x256xf32> -> vector<8x256xf32>
    %cst_3 = arith.constant 0.000000e+00 : f32
    %3 = vector.broadcast %cst_3 : f32 to vector<8x256xf32>
    %4 = arith.maximumf %2, %3 : vector<8x256xf32>
    %5 = arith.truncf %4 : vector<8x256xf32> to vector<8x256xbf16>
    %c0_4 = arith.constant 0 : index
    %c0_5 = arith.constant 0 : index
    %6 = vector.load %arg3[%c0_4, %c0_5] : memref<256x256xbf16, #tpu.memory_space<vmem>>, vector<256x256xbf16>
    %cst_6 = arith.constant dense<0.000000e+00> : vector<8x256xf32>
    %7 = tpu.matmul %5, %6, %cst_6 {dimension_numbers = #tpu.dot_dimension_numbers<[1], [0], [0], [1], [0, 0, 1, 1], [], []>} : vector<8x256xbf16>, vector<256x256xbf16>, vector<8x256xf32> -> vector<8x256xf32>
    %c0_7 = arith.constant 0 : index
    %c0_8 = arith.constant 0 : index
    %8 = vector.load %arg4[%c0_7, %c0_8] : memref<4x256xf32, #tpu.memory_space<vmem>>, vector<1x256xf32>
    %9 = vector.broadcast %8 : vector<1x256xf32> to vector<8x256xf32>
    %10 = arith.addf %7, %9 : vector<8x256xf32>
    %cst_9 = arith.constant 0.000000e+00 : f32
    %11 = vector.broadcast %cst_9 : f32 to vector<8x256xf32>
    %12 = arith.maximumf %10, %11 : vector<8x256xf32>
    %c1 = arith.constant 1 : index
    %c0_10 = arith.constant 0 : index
    %13 = vector.load %arg4[%c1, %c0_10] : memref<4x256xf32, #tpu.memory_space<vmem>>, vector<1x256xf32>
    %cst_11 = arith.constant dense<0.000000e+00> : vector<1x8xf32>
    %14 = tpu.matmul %13, %12, %cst_11 {dimension_numbers = #tpu.dot_dimension_numbers<[1], [1], [0], [0], [0, 0, 1, 0], [], []>} : vector<1x256xf32>, vector<8x256xf32>, vector<1x8xf32> -> vector<1x8xf32>
    %c2 = arith.constant 2 : index
    %c0_12 = arith.constant 0 : index
    %15 = vector.load %arg4[%c2, %c0_12] : memref<4x256xf32, #tpu.memory_space<vmem>>, vector<1x256xf32>
    %16 = arith.mulf %12, %12 : vector<8x256xf32>
    %cst_13 = arith.constant dense<0.000000e+00> : vector<1x8xf32>
    %17 = tpu.matmul %15, %16, %cst_13 {dimension_numbers = #tpu.dot_dimension_numbers<[1], [1], [0], [0], [0, 0, 1, 0], [], []>} : vector<1x256xf32>, vector<8x256xf32>, vector<1x8xf32> -> vector<1x8xf32>
    %c3 = arith.constant 3 : index
    %c0_14 = arith.constant 0 : index
    %18 = vector.load %arg4[%c3, %c0_14] : memref<4x256xf32, #tpu.memory_space<vmem>>, vector<1x1xf32>
    %19 = vector.broadcast %18 : vector<1x1xf32> to vector<1x8xf32>
    %20 = arith.addf %14, %19 : vector<1x8xf32>
    %c0_15 = arith.constant 0 : index
    %c0_16 = arith.constant 0 : index
    %21 = vector.load %arg5[%c0_15, %c0_16] : memref<2x8xf32, #tpu.memory_space<vmem>>, vector<1x8xf32>
    tpu.vector_store %arg5[%c0_15, %c0_16], %20 {strides = array<i32>} : memref<2x8xf32, #tpu.memory_space<vmem>>, vector<1x8xf32>,
    %22 = math.log %17 : vector<1x8xf32>
    %c1_17 = arith.constant 1 : index
    %c0_18 = arith.constant 0 : index
    %23 = vector.load %arg5[%c1_17, %c0_18] : memref<2x8xf32, #tpu.memory_space<vmem>>, vector<1x8xf32>
    tpu.vector_store %arg5[%c1_17, %c0_18], %22 {strides = array<i32>} : memref<2x8xf32, #tpu.memory_space<vmem>>, vector<1x8xf32>,
    return
  }
  func.func @transform_0(%arg0: i32) -> (i32, i32) {
    %c0_i32 = arith.constant 0 : i32
    %c0_i32_0 = arith.constant 0 : i32
    return %arg0, %c0_i32 : i32, i32
  }
  func.func @transform_1(%arg0: i32) -> (i32, i32) {
    %c0_i32 = arith.constant 0 : i32
    %c0_i32_0 = arith.constant 0 : i32
    %c0_i32_1 = arith.constant 0 : i32
    return %c0_i32, %c0_i32_0 : i32, i32
  }
  func.func @transform_2(%arg0: i32) -> (i32, i32) {
    %c0_i32 = arith.constant 0 : i32
    %c0_i32_0 = arith.constant 0 : i32
    %c0_i32_1 = arith.constant 0 : i32
    return %c0_i32, %c0_i32_0 : i32, i32
  }
  func.func @transform_3(%arg0: i32) -> (i32, i32) {
    %c0_i32 = arith.constant 0 : i32
    %c0_i32_0 = arith.constant 0 : i32
    %c0_i32_1 = arith.constant 0 : i32
    return %c0_i32, %c0_i32_0 : i32, i32
  }
  func.func @transform_4(%arg0: i32) -> (i32, i32) {
    %c0_i32 = arith.constant 0 : i32
    %c0_i32_0 = arith.constant 0 : i32
    return %c0_i32, %arg0 : i32, i32
  }
}

</mosaic_0001>

<llo_original>
// kernel: tpu_custom_call.1
$region0: #{tpu_custom_call.1}
  #allocation0 [shape = 'u32[]', space=smem, size = 0x4, offset = 0x4, fixed_abs, tag = 'smem constant byte address 0x4 - core index']
  #allocation1 [shape = 'u32[144,128]{1,0:T(1,128)}', space=vmem, size = 0x12000, scoped, tag = 'internal scratch']
  %s0 = inlined_call_operand.hbm [shape: bf16[8,8], index: 0, kind: input, shape index: {}]
  %s1 = inlined_call_operand.hbm [shape: bf16[8,256], index: 1, kind: input, shape index: {}]
  %s2 = inlined_call_operand.hbm [shape: bf16[256,256], index: 2, kind: input, shape index: {}]
  %s3 = inlined_call_operand.vmem [shape: f32[4,256], index: 3, kind: input, shape index: {}]
  %s4 = inlined_call_operand.hbm [shape: f32[2,8], index: 4, kind: output, shape index: {}]
  %s5 = sld [smem:[#allocation0]]
  $region38: #{tpu_custom_call.1} parent=0
    _
  %s7 = ssub.s32 1, %s5
  %s8 = scalar_select 0, %s7, %s5
  $region1: #{tpu_custom_call.1} parent=0
    #allocation2 [shape = 'u8[2048]{0}', space=vmem, size = 0x800, scoped, tag = 'input window, operand 0, single buffered']
    #allocation3 [shape = 's32[1]{0}', space=sflag, size = 0x4, scoped, tag = 'scoped memory for tpu_custom_call.1']
    #allocation4 [shape = 's32[1]{0}', space=sflag, size = 0x4, scoped, tag = 'scoped memory for tpu_custom_call.1']
    #allocation5 [shape = 'u8[4096]{0}', space=vmem, size = 0x1000, scoped, tag = 'input window, operand 1, single buffered']
    #allocation6 [shape = 's32[1]{0}', space=sflag, size = 0x4, scoped, tag = 'scoped memory for tpu_custom_call.1']
    #allocation7 [shape = 'u8[131072]{0}', space=vmem, size = 0x20000, scoped, tag = 'input window, operand 2, single buffered']
    #allocation8 [shape = 'u8[1024]{0}', space=vmem, size = 0x400, scoped, tag = 'output window, operand 0, single buffered']
    %9 = vsyncpa [#allocation3], 0
    %10 = vsyncpa [#allocation6], 0
    %11 = vsyncpa [#allocation4], 0
    // Predicated region
    $region2: #{tpu_custom_call.1} parent=1 // pred_check
      _
    $region3: #{tpu_custom_call.1} parent=1 // pred_check_branch
      %13 = sbr.rel (0) target = $region5
    $region4: #{tpu_custom_call.1} parent=1 // pred_region
      %s15 = ssub.s32 64, 64
      %16 = vsyncadd [#allocation3], %s15
      %s18 = sshll.u32 [#allocation2], 4
      %s19 = int_to_ptr.vmem [resolvable:$true] %s18
      %21 = dma.hbm_to_vmem [thread:$0]  %s0, 64, %s19, [#allocation3]
    $region5: #{tpu_custom_call.1} parent=1 // pred_fallthru
      _
    // Predicated region
    $region6: #{tpu_custom_call.1} parent=1 // pred_check
      _
    $region7: #{tpu_custom_call.1} parent=1 // pred_check_branch
      %23 = sbr.rel (0) target = $region9
    $region8: #{tpu_custom_call.1} parent=1 // pred_region
      %s25 = ssub.s32 128, 128
      %26 = vsyncadd [#allocation6], %s25
      %s28 = sshll.u32 [#allocation5], 4
      %s29 = int_to_ptr.vmem [resolvable:$true] %s28
      %31 = dma.hbm_to_vmem [thread:$0]  %s1, 128, %s29, [#allocation6]
    $region9: #{tpu_custom_call.1} parent=1 // pred_fallthru
      _
    // Predicated region
    $region10: #{tpu_custom_call.1} parent=1 // pred_check
      _
    $region11: #{tpu_custom_call.1} parent=1 // pred_check_branch
      %33 = sbr.rel (0) target = $region13
    $region12: #{tpu_custom_call.1} parent=1 // pred_region
      %s35 = ssub.s32 4096, 4096
      %36 = vsyncadd [#allocation6], %s35
      %s37 = sshll.u32 [#allocation7], 4
      %s38 = int_to_ptr.vmem [resolvable:$true] %s37
      %43 = dma.hbm_to_vmem [thread:$0]  %s2, 4096, %s38, [#allocation6], 128, 128, 8
    $region13: #{tpu_custom_call.1} parent=1 // pred_fallthru
      _
    // Predicated region
    $region14: #{tpu_custom_call.1} parent=1 // pred_check
      _
    $region15: #{tpu_custom_call.1} parent=1 // pred_check_branch
      %45 = sbr.rel (0) target = $region17
    $region16: #{tpu_custom_call.1} parent=1 // pred_region
      _
    $region17: #{tpu_custom_call.1} parent=1 // pred_fallthru
      _
    // Predicated region
    $region18: #{tpu_custom_call.1} parent=1 // pred_check
      _
    $region19: #{tpu_custom_call.1} parent=1 // pred_check_branch
      %47 = sbr.rel (0) target = $region21
    $region20: #{tpu_custom_call.1} parent=1 // pred_region
      %48 = dma.done [#allocation3], 64
    $region21: #{tpu_custom_call.1} parent=1 // pred_fallthru
      _
    // Predicated region
    $region22: #{tpu_custom_call.1} parent=1 // pred_check
      _
    $region23: #{tpu_custom_call.1} parent=1 // pred_check_branch
      %50 = sbr.rel (0) target = $region25
    $region24: #{tpu_custom_call.1} parent=1 // pred_region
      %51 = dma.done [#allocation6], 128
    $region25: #{tpu_custom_call.1} parent=1 // pred_fallthru
      _
    // Predicated region
    $region26: #{tpu_custom_call.1} parent=1 // pred_check
      _
    $region27: #{tpu_custom_call.1} parent=1 // pred_check_branch
      %53 = sbr.rel (0) target = $region29
    $region28: #{tpu_custom_call.1} parent=1 // pred_region
      %54 = dma.done [#allocation6], 4096
    $region29: #{tpu_custom_call.1} parent=1 // pred_fallthru
      _
    %v56 = vld [vmem:[#allocation2] sm:$0xf]
    %v57 = vld [vmem:[#allocation5] sm:$0xff]
    %v59 = vunpack.c.l.b16 %v57
    %v60 = vunpack.c.h.b16 %v57
    %v61 = vpack.c.b16 %v59, %v59
    %v62 = vpack.c.b16 %v60, %v60
    %vm63 = vcmask 64512
    %v65 = vsel %vm63, %v56, 0
    %vm67 = vcmask 1043456
    %v69 = vsel %vm67, %v61, 0
    %v72 = vsel %vm67, %v62, 0
    %74 = vmatprep.subr.bf16.mxu0 %v72
    %75 = vmatpush1.bf16.msra.mxu0 %v69
    %76 = vmatprep.subr.bf16.mxu0 0
    %77 = vmatpush1.bf16.msra.mxu0 0
    %78 = vmatprep.subr.bf16.mxu0 0
    %79 = vmatpush1.bf16.msra.mxu0 0
    %80 = vmatprep.subr.bf16.mxu0 0
    %81 = vmatpush1.bf16.msra.mxu0 0
    %82 = vmatprep.subr.bf16.mxu0 0
    %83 = vmatpush1.bf16.msra.mxu0 0
    %84 = vmatprep.subr.bf16.mxu0 0
    %85 = vmatpush1.bf16.msra.mxu0 0
    %86 = vmatprep.subr.bf16.mxu0 0
    %87 = vmatpush1.bf16.msra.mxu0 0
    %88 = vmatprep.subr.bf16.mxu0 0
    %89 = vmatpush1.bf16.msra.mxu0 0
    %90 = vmatprep.subr.bf16.mxu0 0
    %91 = vmatpush1.bf16.msra.mxu0 0
    %92 = vmatprep.subr.bf16.mxu0 0
    %93 = vmatpush1.bf16.msra.mxu0 0
    %94 = vmatprep.subr.bf16.mxu0 0
    %95 = vmatpush1.bf16.msra.mxu0 0
    %96 = vmatprep.subr.bf16.mxu0 0
    %97 = vmatpush1.bf16.msra.mxu0 0
    %98 = vmatprep.subr.bf16.mxu0 0
    %99 = vmatpush1.bf16.msra.mxu0 0
    %100 = vmatprep.subr.bf16.mxu0 0
    %101 = vmatpush1.bf16.msra.mxu0 0
    %102 = vmatprep.subr.bf16.mxu0 0
    %103 = vmatpush1.bf16.msra.mxu0 0
    %104 = vmatprep.subr.bf16.mxu0 0
    %105 = vmatpush1.bf16.msra.mxu0 0
    %106 = vmatprep.mubr.bf16.mxu0 0
    %107 = vmatmul.mubr.bf16.gmra.mrb[0].mxu0 %v65
    %v108 = vpop.f32.mrb[0].mxu0
    %v109 = vadd.f32 0.0, %v108
    %v110 = vpop.f32.mrb[0].mxu0
    %v111 = vadd.f32 0.0, %v110
    %v112 = vpop.f32.mrb[0].mxu0
    %v113 = vpop.f32.mrb[0].mxu0
    %114 = vdwg.mxu0
    %v115 = vmax.f32 %v109, 0.0
    %v116 = vmax.f32 %v111, 0.0
    %v117 = vpack.c.bf16 %v115, %v115
    %v118 = vpack.c.bf16 %v116, %v116
    %v119 = vld [vmem:[#allocation7] sm:$0xff]
    %v120 = vld [vmem:[#allocation7 + $0x8] sm:$0xff]
    %v121 = vld [vmem:[#allocation7 + $0x10] sm:$0xff]
    %v122 = vld [vmem:[#allocation7 + $0x18] sm:$0xff]
    %v123 = vld [vmem:[#allocation7 + $0x20] sm:$0xff]
    %v124 = vld [vmem:[#allocation7 + $0x28] sm:$0xff]
    %v125 = vld [vmem:[#allocation7 + $0x30] sm:$0xff]
    %v126 = vld [vmem:[#allocation7 + $0x38] sm:$0xff]
    %v127 = vld [vmem:[#allocation7 + $0x40] sm:$0xff]
    %v128 = vld [vmem:[#allocation7 + $0x48] sm:$0xff]
    %v129 = vld [vmem:[#allocation7 + $0x50] sm:$0xff]
    %v130 = vld [vmem:[#allocation7 + $0x58] sm:$0xff]
    %v131 = vld [vmem:[#allocation7 + $0x60] sm:$0xff]
    %v132 = vld [vmem:[#allocation7 + $0x68] sm:$0xff]
    %v133 = vld [vmem:[#allocation7 + $0x70] sm:$0xff]
    %v134 = vld [vmem:[#allocation7 + $0x78] sm:$0xff]
    %v135 = vld [vmem:[#allocation7 + $0x80] sm:$0xff]
    %v136 = vld [vmem:[#allocation7 + $0x88] sm:$0xff]
    %v137 = vld [vmem:[#allocation7 + $0x90] sm:$0xff]
    %v138 = vld [vmem:[#allocation7 + $0x98] sm:$0xff]
    %v139 = vld [vmem:[#allocation7 + $0xa0] sm:$0xff]
    %v140 = vld [vmem:[#allocation7 + $0xa8] sm:$0xff]
    %v141 = vld [vmem:[#allocation7 + $0xb0] sm:$0xff]
    %v142 = vld [vmem:[#allocation7 + $0xb8] sm:$0xff]
    %v143 = vld [vmem:[#allocation7 + $0xc0] sm:$0xff]
    %v144 = vld [vmem:[#allocation7 + $0xc8] sm:$0xff]
    %v145 = vld [vmem:[#allocation7 + $0xd0] sm:$0xff]
    %v146 = vld [vmem:[#allocation7 + $0xd8] sm:$0xff]
    %v147 = vld [vmem:[#allocation7 + $0xe0] sm:$0xff]
    %v148 = vld [vmem:[#allocation7 + $0xe8] sm:$0xff]
    %v149 = vld [vmem:[#allocation7 + $0xf0] sm:$0xff]
    %v150 = vld [vmem:[#allocation7 + $0xf8] sm:$0xff]
    %v151 = vld [vmem:[%s3] ss:$4 sm:$0x3]
    %v153 = vlaneseq
    %v154 = vshrl.u32 %v153, 7
    %v155 = vsub.s32 0, %v154
    %v156 = vrot.slane %v151, %v155
    %v157 = vlaneseq
    %v158 = vshrl.u32 %v157, 7
    %v159 = vsub.s32 1, %v158
    %v160 = vrot.slane %v151, %v159
    %v195 = vunpack.c.l.b16 %v119
    %v196 = vunpack.c.h.b16 %v119
    %v197 = vunpack.c.l.b16 %v120
    %v198 = vunpack.c.h.b16 %v120
    %v199 = vunpack.c.l.b16 %v121
    %v200 = vunpack.c.h.b16 %v121
    %v201 = vunpack.c.l.b16 %v122
    %v202 = vunpack.c.h.b16 %v122
    %v203 = vunpack.c.l.b16 %v123
    %v204 = vunpack.c.h.b16 %v123
    %v205 = vunpack.c.l.b16 %v124
    %v206 = vunpack.c.h.b16 %v124
    %v207 = vunpack.c.l.b16 %v125
    %v208 = vunpack.c.h.b16 %v125
    %v209 = vunpack.c.l.b16 %v126
    %v210 = vunpack.c.h.b16 %v126
    %v211 = vunpack.c.l.b16 %v127
    %v212 = vunpack.c.h.b16 %v127
    %v213 = vunpack.c.l.b16 %v128
    %v214 = vunpack.c.h.b16 %v128
    %v215 = vunpack.c.l.b16 %v129
    %v216 = vunpack.c.h.b16 %v129
    %v217 = vunpack.c.l.b16 %v130
    %v218 = vunpack.c.h.b16 %v130
    %v219 = vunpack.c.l.b16 %v131
    %v220 = vunpack.c.h.b16 %v131
    %v221 = vunpack.c.l.b16 %v132
    %v222 = vunpack.c.h.b16 %v132
    %v223 = vunpack.c.l.b16 %v133
    %v224 = vunpack.c.h.b16 %v133
    %v225 = vunpack.c.l.b16 %v134
    %v226 = vunpack.c.h.b16 %v134
    %v227 = vunpack.c.l.b16 %v135
    %v228 = vunpack.c.h.b16 %v135
    %v229 = vunpack.c.l.b16 %v136
    %v230 = vunpack.c.h.b16 %v136
    %v231 = vunpack.c.l.b16 %v137
    %v232 = vunpack.c.h.b16 %v137
    %v233 = vunpack.c.l.b16 %v138
    %v234 = vunpack.c.h.b16 %v138
    %v235 = vunpack.c.l.b16 %v139
    %v236 = vunpack.c.h.b16 %v139
    %v237 = vunpack.c.l.b16 %v140
    %v238 = vunpack.c.h.b16 %v140
    %v239 = vunpack.c.l.b16 %v141
    %v240 = vunpack.c.h.b16 %v141
    %v241 = vunpack.c.l.b16 %v142
    %v242 = vunpack.c.h.b16 %v142
    %v243 = vunpack.c.l.b16 %v143
    %v244 = vunpack.c.h.b16 %v143
    %v245 = vunpack.c.l.b16 %v144
    %v246 = vunpack.c.h.b16 %v144
    %v247 = vunpack.c.l.b16 %v145
    %v248 = vunpack.c.h.b16 %v145
    %v249 = vunpack.c.l.b16 %v146
    %v250 = vunpack.c.h.b16 %v146
    %v251 = vunpack.c.l.b16 %v147
    %v252 = vunpack.c.h.b16 %v147
    %v253 = vunpack.c.l.b16 %v148
    %v254 = vunpack.c.h.b16 %v148
    %v255 = vunpack.c.l.b16 %v149
    %v256 = vunpack.c.h.b16 %v149
    %v257 = vunpack.c.l.b16 %v150
    %v258 = vunpack.c.h.b16 %v150
    %v259 = vpack.c.b16 %v197, %v195
    %v260 = vpack.c.b16 %v198, %v196
    %v261 = vpack.c.b16 %v201, %v199
    %v262 = vpack.c.b16 %v202, %v200
    %v263 = vpack.c.b16 %v205, %v203
    %v264 = vpack.c.b16 %v206, %v204
    %v265 = vpack.c.b16 %v209, %v207
    %v266 = vpack.c.b16 %v210, %v208
    %v267 = vpack.c.b16 %v213, %v211
    %v268 = vpack.c.b16 %v214, %v212
    %v269 = vpack.c.b16 %v217, %v215
    %v270 = vpack.c.b16 %v218, %v216
    %v271 = vpack.c.b16 %v221, %v219
    %v272 = vpack.c.b16 %v222, %v220
    %v273 = vpack.c.b16 %v225, %v223
    %v274 = vpack.c.b16 %v226, %v224
    %v275 = vpack.c.b16 %v229, %v227
    %v276 = vpack.c.b16 %v230, %v228
    %v277 = vpack.c.b16 %v233, %v231
    %v278 = vpack.c.b16 %v234, %v232
    %v279 = vpack.c.b16 %v237, %v235
    %v280 = vpack.c.b16 %v238, %v236
    %v281 = vpack.c.b16 %v241, %v239
    %v282 = vpack.c.b16 %v242, %v240
    %v283 = vpack.c.b16 %v245, %v243
    %v284 = vpack.c.b16 %v246, %v244
    %v285 = vpack.c.b16 %v249, %v247
    %v286 = vpack.c.b16 %v250, %v248
    %v287 = vpack.c.b16 %v253, %v251
    %v288 = vpack.c.b16 %v254, %v252
    %v289 = vpack.c.b16 %v257, %v255
    %v290 = vpack.c.b16 %v258, %v256
    %323 = vmatprep.subr.bf16.mxu0 %v260
    %324 = vmatpush1.bf16.msra.mxu0 %v259
    %325 = vmatprep.subr.bf16.mxu0 %v262
    %326 = vmatpush1.bf16.msra.mxu0 %v261
    %327 = vmatprep.subr.bf16.mxu0 %v264
    %328 = vmatpush1.bf16.msra.mxu0 %v263
    %329 = vmatprep.subr.bf16.mxu0 %v266
    %330 = vmatpush1.bf16.msra.mxu0 %v265
    %331 = vmatprep.subr.bf16.mxu0 %v268
    %332 = vmatpush1.bf16.msra.mxu0 %v267
    %333 = vmatprep.subr.bf16.mxu0 %v270
    %334 = vmatpush1.bf16.msra.mxu0 %v269
    %335 = vmatprep.subr.bf16.mxu0 %v272
    %336 = vmatpush1.bf16.msra.mxu0 %v271
    %337 = vmatprep.subr.bf16.mxu0 %v274
    %338 = vmatpush1.bf16.msra.mxu0 %v273
    %339 = vmatprep.subr.bf16.mxu0 %v276
    %340 = vmatpush1.bf16.msra.mxu0 %v275
    %341 = vmatprep.subr.bf16.mxu0 %v278
    %342 = vmatpush1.bf16.msra.mxu0 %v277
    %343 = vmatprep.subr.bf16.mxu0 %v280
    %344 = vmatpush1.bf16.msra.mxu0 %v279
    %345 = vmatprep.subr.bf16.mxu0 %v282
    %346 = vmatpush1.bf16.msra.mxu0 %v281
    %347 = vmatprep.subr.bf16.mxu0 %v284
    %348 = vmatpush1.bf16.msra.mxu0 %v283
    %349 = vmatprep.subr.bf16.mxu0 %v286
    %350 = vmatpush1.bf16.msra.mxu0 %v285
    %351 = vmatprep.subr.bf16.mxu0 %v288
    %352 = vmatpush1.bf16.msra.mxu0 %v287
    %353 = vmatprep.subr.bf16.mxu0 %v290
    %354 = vmatpush1.bf16.msra.mxu0 %v289
    %355 = vmatprep.mubr.bf16.mxu0 %v118
    %356 = vmatmul.mubr.bf16.gmra.mrb[0].mxu0 %v117
    %v357 = vpop.f32.mrb[0].mxu0
    %v358 = vadd.f32 %v156, %v357
    %v359 = vpop.f32.mrb[0].mxu0
    %v360 = vadd.f32 %v160, %v359
    %v361 = vpop.f32.mrb[0].mxu0
    %v362 = vpop.f32.mrb[0].mxu0
    %363 = vdwg.mxu0
    %v364 = vmax.f32 %v358, 0.0
    %v365 = vmax.f32 %v360, 0.0
    %s366 = scalar_lea.vmem %s3, 1
    %v367 = vld [vmem:[%s366] ss:$4 sm:$0x3]
    %s368 = scalar_lea.vmem %s3, 2
    %v369 = vld [vmem:[%s368] ss:$4 sm:$0x3]
    %v370 = vmul.f32 %v364, %v364
    %v371 = vmul.f32 %v365, %v365
    %v373 = vlaneseq
    %v374 = vshrl.u32 %v373, 7
    %v375 = vsub.s32 0, %v374
    %v376 = vrot.slane %v369, %v375
    %v377 = vlaneseq
    %v378 = vshrl.u32 %v377, 7
    %v379 = vsub.s32 1, %v378
    %v380 = vrot.slane %v369, %v379
    %383 = vmatprep.subr.mxu0 %v371
    %384 = vmatpush1.xpose.msra.mxu0 %v370
    %385 = vmatprep.subr.mxu0 0.0
    %386 = vmatpush1.xpose.msra.mxu0 0.0
    %387 = vmatprep.subr.mxu0 0.0
    %388 = vmatpush1.xpose.msra.mxu0 0.0
    %389 = vmatprep.subr.mxu0 0.0
    %390 = vmatpush1.xpose.msra.mxu0 0.0
    %391 = vmatprep.subr.mxu0 0.0
    %392 = vmatpush1.xpose.msra.mxu0 0.0
    %393 = vmatprep.subr.mxu0 0.0
    %394 = vmatpush1.xpose.msra.mxu0 0.0
    %395 = vmatprep.subr.mxu0 0.0
    %396 = vmatpush1.xpose.msra.mxu0 0.0
    %397 = vmatprep.subr.mxu0 0.0
    %398 = vmatpush1.xpose.msra.mxu0 0.0
    %399 = vmatprep.subr.mxu0 0.0
    %400 = vmatpush1.xpose.msra.mxu0 0.0
    %401 = vmatprep.subr.mxu0 0.0
    %402 = vmatpush1.xpose.msra.mxu0 0.0
    %403 = vmatprep.subr.mxu0 0.0
    %404 = vmatpush1.xpose.msra.mxu0 0.0
    %405 = vmatprep.subr.mxu0 0.0
    %406 = vmatpush1.xpose.msra.mxu0 0.0
    %407 = vmatprep.subr.mxu0 0.0
    %408 = vmatpush1.xpose.msra.mxu0 0.0
    %409 = vmatprep.subr.mxu0 0.0
    %410 = vmatpush1.xpose.msra.mxu0 0.0
    %411 = vmatprep.subr.mxu0 0.0
    %412 = vmatpush1.xpose.msra.mxu0 0.0
    %413 = vmatprep.subr.mxu0 0.0
    %414 = vmatpush1.xpose.msra.mxu0 0.0
    %415 = vmatprep.subr.mxu0 0.0
    %416 = vmatpush1.xpose.msra.mxu0 0.0
    %417 = vmatprep.subr.mxu0 0.0
    %418 = vmatpush1.xpose.msra.mxu0 0.0
    %419 = vmatprep.subr.mxu0 0.0
    %420 = vmatpush1.xpose.msra.mxu0 0.0
    %421 = vmatprep.subr.mxu0 0.0
    %422 = vmatpush1.xpose.msra.mxu0 0.0
    %423 = vmatprep.subr.mxu0 0.0
    %424 = vmatpush1.xpose.msra.mxu0 0.0
    %425 = vmatprep.subr.mxu0 0.0
    %426 = vmatpush1.xpose.msra.mxu0 0.0
    %427 = vmatprep.subr.mxu0 0.0
    %428 = vmatpush1.xpose.msra.mxu0 0.0
    %429 = vmatprep.subr.mxu0 0.0
    %430 = vmatpush1.xpose.msra.mxu0 0.0
    %431 = vmatprep.subr.mxu0 0.0
    %432 = vmatpush1.xpose.msra.mxu0 0.0
    %433 = vmatprep.subr.mxu0 0.0
    %434 = vmatpush1.xpose.msra.mxu0 0.0
    %435 = vmatprep.subr.mxu0 0.0
    %436 = vmatpush1.xpose.msra.mxu0 0.0
    %437 = vmatprep.subr.mxu0 0.0
    %438 = vmatpush1.xpose.msra.mxu0 0.0
    %439 = vmatprep.subr.mxu0 0.0
    %440 = vmatpush1.xpose.msra.mxu0 0.0
    %441 = vmatprep.subr.mxu0 0.0
    %442 = vmatpush1.xpose.msra.mxu0 0.0
    %443 = vmatprep.subr.mxu0 0.0
    %444 = vmatpush1.xpose.msra.mxu0 0.0
    %445 = vmatprep.subr.mxu0 0.0
    %446 = vmatpush1.xpose.msra.mxu0 0.0
    %447 = vmatprep.mubr.f32.mxu0 %v380
    %448 = vmatmul.mubr.f32.gmra.mrb[0].mxu0 %v376
    %v449 = vpop.f32.mrb[0].mxu0
    %v450 = vadd.f32 0.0, %v449
    %v451 = vpop.f32.mrb[0].mxu0
    %452 = vdwg.mxu0
    %v453 = vld [vmem:[%s3 + $0x3] sm:$0x1]
    %455 = vset.pattern.permute.xlu0 0
    %456 = vperm.xlu0 %455, %v453
    %v457 = vpop.permute.xlu0 %456
    %v460 = vunpack.c.l.s4 839922192
    %v461 = vunpack.c.0.s8 %v460
    %v462 = vlaneseq
    %v463 = vshrl.u32 %v462, 7
    %v464 = vsub.s32 %v461, %v463
    %v465 = vrot.slane %v457, %v464
    %v467 = vlaneseq
    %v468 = vshrl.u32 %v467, 7
    %v469 = vsub.s32 0, %v468
    %v470 = vrot.slane %v367, %v469
    %v471 = vlaneseq
    %v472 = vshrl.u32 %v471, 7
    %v473 = vsub.s32 1, %v472
    %v474 = vrot.slane %v367, %v473
    %477 = vmatprep.subr.mxu0 %v365
    %478 = vmatpush1.xpose.msra.mxu0 %v364
    %479 = vmatprep.subr.mxu0 0.0
    %480 = vmatpush1.xpose.msra.mxu0 0.0
    %481 = vmatprep.subr.mxu0 0.0
    %482 = vmatpush1.xpose.msra.mxu0 0.0
    %483 = vmatprep.subr.mxu0 0.0
    %484 = vmatpush1.xpose.msra.mxu0 0.0
    %485 = vmatprep.subr.mxu0 0.0
    %486 = vmatpush1.xpose.msra.mxu0 0.0
    %487 = vmatprep.subr.mxu0 0.0
    %488 = vmatpush1.xpose.msra.mxu0 0.0
    %489 = vmatprep.subr.mxu0 0.0
    %490 = vmatpush1.xpose.msra.mxu0 0.0
    %491 = vmatprep.subr.mxu0 0.0
    %492 = vmatpush1.xpose.msra.mxu0 0.0
    %493 = vmatprep.subr.mxu0 0.0
    %494 = vmatpush1.xpose.msra.mxu0 0.0
    %495 = vmatprep.subr.mxu0 0.0
    %496 = vmatpush1.xpose.msra.mxu0 0.0
    %497 = vmatprep.subr.mxu0 0.0
    %498 = vmatpush1.xpose.msra.mxu0 0.0
    %499 = vmatprep.subr.mxu0 0.0
    %500 = vmatpush1.xpose.msra.mxu0 0.0
    %501 = vmatprep.subr.mxu0 0.0
    %502 = vmatpush1.xpose.msra.mxu0 0.0
    %503 = vmatprep.subr.mxu0 0.0
    %504 = vmatpush1.xpose.msra.mxu0 0.0
    %505 = vmatprep.subr.mxu0 0.0
    %506 = vmatpush1.xpose.msra.mxu0 0.0
    %507 = vmatprep.subr.mxu0 0.0
    %508 = vmatpush1.xpose.msra.mxu0 0.0
    %509 = vmatprep.subr.mxu0 0.0
    %510 = vmatpush1.xpose.msra.mxu0 0.0
    %511 = vmatprep.subr.mxu0 0.0
    %512 = vmatpush1.xpose.msra.mxu0 0.0
    %513 = vmatprep.subr.mxu0 0.0
    %514 = vmatpush1.xpose.msra.mxu0 0.0
    %515 = vmatprep.subr.mxu0 0.0
    %516 = vmatpush1.xpose.msra.mxu0 0.0
    %517 = vmatprep.subr.mxu0 0.0
    %518 = vmatpush1.xpose.msra.mxu0 0.0
    %519 = vmatprep.subr.mxu0 0.0
    %520 = vmatpush1.xpose.msra.mxu0 0.0
    %521 = vmatprep.subr.mxu0 0.0
    %522 = vmatpush1.xpose.msra.mxu0 0.0
    %523 = vmatprep.subr.mxu0 0.0
    %524 = vmatpush1.xpose.msra.mxu0 0.0
    %525 = vmatprep.subr.mxu0 0.0
    %526 = vmatpush1.xpose.msra.mxu0 0.0
    %527 = vmatprep.subr.mxu0 0.0
    %528 = vmatpush1.xpose.msra.mxu0 0.0
    %529 = vmatprep.subr.mxu0 0.0
    %530 = vmatpush1.xpose.msra.mxu0 0.0
    %531 = vmatprep.subr.mxu0 0.0
    %532 = vmatpush1.xpose.msra.mxu0 0.0
    %533 = vmatprep.subr.mxu0 0.0
    %534 = vmatpush1.xpose.msra.mxu0 0.0
    %535 = vmatprep.subr.mxu0 0.0
    %536 = vmatpush1.xpose.msra.mxu0 0.0
    %537 = vmatprep.subr.mxu0 0.0
    %538 = vmatpush1.xpose.msra.mxu0 0.0
    %539 = vmatprep.subr.mxu0 0.0
    %540 = vmatpush1.xpose.msra.mxu0 0.0
    %541 = vmatprep.mubr.f32.mxu0 %v474
    %542 = vmatmul.mubr.f32.gmra.mrb[0].mxu0 %v470
    %v543 = vpop.f32.mrb[0].mxu0
    %v544 = vadd.f32 %v465, %v543
    %v545 = vpop.f32.mrb[0].mxu0
    %546 = vdwg.mxu0
    %vm547 = vcmask 57344
    %548 = vst.msk [vmem:[#allocation8] sm:$0x1] %vm547, %v544
    %v549 = vlog2.pop %v450
    %v550 = vmul.f32 %v549, 0.6931472
    %551 = vst.msk [vmem:[#allocation8 + $0x1] sm:$0x1] %vm547, %v550
    // Predicated region
    $region30: #{tpu_custom_call.1} parent=1 // pred_check
      _
    $region31: #{tpu_custom_call.1} parent=1 // pred_check_branch
      %553 = sbr.rel (0) target = $region33
    $region32: #{tpu_custom_call.1} parent=1 // pred_region
      %s555 = ssub.s32 32, 32
      %556 = vsyncadd [#allocation4], %s555
      %s558 = sshll.u32 [#allocation8], 4
      %s559 = int_to_ptr.vmem [resolvable:$true] %s558
      %561 = dma.vmem_to_hbm [thread:$0]  %s559, 32, %s4, [#allocation4]
    $region33: #{tpu_custom_call.1} parent=1 // pred_fallthru
      _
    // Predicated region
    $region34: #{tpu_custom_call.1} parent=1 // pred_check
      _
    $region35: #{tpu_custom_call.1} parent=1 // pred_check_branch
      %563 = sbr.rel (0) target = $region37
    $region36: #{tpu_custom_call.1} parent=1 // pred_region
      %564 = dma.done [#allocation4], 32
    $region37: #{tpu_custom_call.1} parent=1 // pred_fallthru
      _
    %565 = vsyncpa [#allocation3], 1
    %566 = vsyncpa [#allocation6], 1
    %567 = vsyncpa [#allocation4], 1

</llo_original>
